<compile_context>
chip_gen: v6e
topology: v6e:2x2x1
jax: 0.10.0
libtpu: 0.0.40
codegen_flags: <defaults>
</compile_context>

<pallas_src>
import jax
import jax.numpy as jnp
from jax.experimental import pallas as pl
from jax.experimental.pallas import tpu as pltpu


def _leaky_relu(x, slope=0.2):
    # max(x, slope*x) == LeakyReLU for 0 < slope < 1; one fewer VPU op than where().
    return jnp.maximum(x, slope * x)


def discriminator_kernel(x_ref, w1_ref, b1_ref, w2_ref, b2_ref, w3_ref, b3_ref, o_ref):
    # Layer 1: cast the streamed f32 x tile to the MXU dtype in-kernel, f32 accumulate,
    # bias + LeakyReLU in f32 on the VPU.
    x = x_ref[...].astype(w1_ref.dtype)                                    # (tb, D)
    h1 = jnp.dot(x, w1_ref[...], preferred_element_type=jnp.float32) + b1_ref[...]
    h1 = _leaky_relu(h1)                                                   # (tb, H) f32

    # Layer 2: same pattern; cast the activation back to the MXU dtype only for the dot.
    h2 = jnp.dot(h1.astype(w2_ref.dtype), w2_ref[...],
                 preferred_element_type=jnp.float32) + b2_ref[...]
    h2 = _leaky_relu(h2)                                                   # (tb, H) f32

    # Layer 3 (out_features == 1): contract on H with the result already transposed:
    # (1, H) x (tb, H)^T -> (1, tb).  Output is lane-dense; negligible MXU work (M == 1).
    h3 = jax.lax.dot_general(
        w3_ref[...], h2,
        dimension_numbers=(((1,), (1,)), ((), ())),
        preferred_element_type=jnp.float32,
    ) + b3_ref[0]                                                          # (1, tb) f32

    # Sigmoid: exp on the EUP, exact reciprocal (probabilities typically feed a BCE loss).
    o_ref[...] = pl.reciprocal(1.0 + jnp.exp(-h3), approx=False)


def _default_vmem_budget_bytes():
    # 3/4 of physical VMEM: ~48 MiB on v7x (64 MiB/TC), ~96 MiB on v5e/v6e (128 MiB).
    try:
        cap = pltpu.get_tpu_info().vmem_capacity_bytes
    except Exception:
        cap = 64 * 1024 * 1024
    return int(cap) * 3 // 4


def discriminator_forward(x, params, *, tile_b=1024, compute_dtype=jnp.bfloat16,
                          vmem_budget_bytes=None):
    """x: (B, D) f32. params: w1(D,H) b1(1,H) w2(H,H) b2(1,H) w3(H,1) b3(1,1). Returns (B, 1) f32."""
    w1, b1, w2, b2, w3, b3 = params
    B, D = x.shape
    H = w1.shape[1]
    MIN_TILE = 128  # keeps the (1, tile_b) output block lane-aligned when tiling

    if vmem_budget_bytes is None:
        vmem_budget_bytes = _default_vmem_budget_bytes()

    w_item = jnp.dtype(compute_dtype).itemsize

    def vmem_estimate(tb):
        # Pallas allocates 2 buffers per BlockSpec'd operand (including grid-invariant weights).
        x_bytes = 2 * tb * D * 4                                   # streamed f32 x tile
        o_bytes = 2 * 8 * tb * 4                                   # (1, tb) block, 8-sublane padded
        w_bytes = 2 * ((D * H + H * H) * w_item + (3 * H) * 4)     # w1,w2 (bf16) + b1,b2,w3_row (f32)
        act_bytes = 2 * tb * H * 4                                 # h1/h2 f32 temporaries
        return x_bytes + o_bytes + w_bytes + act_bytes

    # Batch tile: single full-array block for small batches; otherwise a multiple of 128
    # (lane-aligned output block) that fits the per-generation VMEM budget.
    tile_b = int(min(int(tile_b), B))
    if tile_b < B:
        tile_b = max(MIN_TILE, (tile_b // MIN_TILE) * MIN_TILE)
        while tile_b > MIN_TILE and vmem_estimate(tile_b) > vmem_budget_bytes:
            tile_b = max(MIN_TILE, ((tile_b // 2) // MIN_TILE) * MIN_TILE)
    grid = (pl.cdiv(B, tile_b),)  # edge tile handled by Pallas masking (no explicit pad copy)

    # Compiler VMEM limit tracks the actual estimate (estimate already double-counts buffers).
    vmem_limit = int(min(vmem_budget_bytes, vmem_estimate(tile_b) + (16 << 20)))

    # Weights go to the MXU dtype once in the wrapper (tiny, one-time); x stays f32 on the wire.
    if x.dtype != jnp.float32:
        x = x.astype(jnp.float32)
    w1_c = w1.astype(compute_dtype)
    w2_c = w2.astype(compute_dtype)
    b1_f = b1.reshape(1, H).astype(jnp.float32)
    b2_f = b2.reshape(1, H).astype(jnp.float32)
    w3_row = w3.reshape(H, 1).T.astype(jnp.float32)   # (1, H), f32 head for accuracy
    b3_s = b3.reshape(1).astype(jnp.float32)          # scalar bias lives in SMEM

    def whole(shape):
        return pl.BlockSpec(shape, lambda i: (0, 0))  # VMEM-resident (constant block index)

    out = pl.pallas_call(
        discriminator_kernel,
        out_shape=jax.ShapeDtypeStruct((1, B), jnp.float32),
        grid_spec=pltpu.PrefetchScalarGridSpec(
            num_scalar_prefetch=0,
            grid=grid,
            in_specs=[
                pl.BlockSpec((tile_b, D), lambda i: (i, 0)),        # x tile (batch-parallel)
                whole((D, H)),                                      # w1
                whole((1, H)),                                      # b1
                whole((H, H)),                                      # w2
                whole((1, H)),                                      # b2
                whole((1, H)),                                      # w3 as a row
                pl.BlockSpec(memory_space=pltpu.MemorySpace.SMEM),  # b3 scalar
            ],
            out_specs=pl.BlockSpec((1, tile_b), lambda i: (0, i)),  # lane-dense (1, B) output
        ),
        compiler_params=pltpu.CompilerParams(
            dimension_semantics=("parallel",),   # batch axis shards across TensorCores
            vmem_limit_bytes=vmem_limit,
        ),
    )(x, w1_c, b1_f, w2_c, b2_f, w3_row, b3_s)

    # (1, B) -> (B, 1): same linear order, pure reshape (no slab slice pass).
    return out.reshape(B, 1)


def init_params(key, input_dim, hidden_dim):
    # Deterministic synthetic init (uniform a la PyTorch's Linear default range).
    ks = jax.random.split(key, 6)

    def linear(kw, kb, fan_in, fan_out):
        bound = 1.0 / jnp.sqrt(fan_in)
        w = jax.random.uniform(kw, (fan_in, fan_out), jnp.float32, -bound, bound)
        b = jax.random.uniform(kb, (1, fan_out), jnp.float32, -bound, bound)
        return w, b

    w1, b1 = linear(ks[0], ks[1], input_dim, hidden_dim)
    w2, b2 = linear(ks[2], ks[3], hidden_dim, hidden_dim)
    w3, b3 = linear(ks[4], ks[5], hidden_dim, 1)
    return (w1, b1, w2, b2, w3, b3)


def reference_forward(x, params, compute_dtype=jnp.bfloat16):
    # NOTE: mirrors the kernel's mixed precision (bf16-rounded MXU inputs, f32 accumulation),
    # so this validates self-consistency of the kernel, not bit-fidelity to a pure-f32
    # PyTorch Discriminator.
    w1, b1, w2, b2, w3, b3 = params
    f32 = jnp.float32
    xq = x.astype(compute_dtype).astype(f32)
    w1q = w1.astype(compute_dtype).astype(f32)
    w2q = w2.astype(compute_dtype).astype(f32)
    h = _leaky_relu(xq @ w1q + b1.reshape(1, -1))
    h = h.astype(compute_dtype).astype(f32)
    h = _leaky_relu(h @ w2q + b2.reshape(1, -1))
    h3 = h @ w3 + b3.reshape(1, 1)
    return jax.nn.sigmoid(h3)


if __name__ == "__main__":
    key = jax.random.PRNGKey(0)
    k_x, k_p = jax.random.split(key)

    batch, input_dim, hidden_dim = 8, 16, 32
    x = jax.random.normal(k_x, (batch, input_dim), jnp.float32)
    params = init_params(k_p, input_dim, hidden_dim)

    out = discriminator_forward(x, params)
    out = jax.block_until_ready(out)

    ref = reference_forward(x, params)
    assert out.shape == (batch, 1), out.shape
    # bf16 matmul inputs (mirrored in the reference) -> small absolute slack on sigmoid outputs.
    assert jnp.allclose(out, ref, atol=2e-3, rtol=0), (out, ref)

    print("KERNEL_OK")
</pallas_src>

<mosaic_0001>
module attributes {stable_mosaic.version = 11 : i64} {
  func.func @discriminator_kernel(%arg0: i32, %arg1: memref<8x16xf32, #tpu.memory_space<vmem>>, %arg2: memref<16x32xbf16, #tpu.memory_space<vmem>>, %arg3: memref<1x32xf32, #tpu.memory_space<vmem>>, %arg4: memref<32x32xbf16, #tpu.memory_space<vmem>>, %arg5: memref<1x32xf32, #tpu.memory_space<vmem>>, %arg6: memref<1x32xf32, #tpu.memory_space<vmem>>, %arg7: memref<1xf32, #tpu.memory_space<smem>>, %arg8: memref<1x8xf32, #tpu.memory_space<vmem>>) attributes {dimension_semantics = [#tpu.dimension_semantics<parallel>], iteration_bounds = array<i64: 1>, scalar_prefetch = 0 : i64, scratch_operands = 0 : i64, tpu.core_type = #tpu.core_type<tc>, window_params = [{transform_indices = @transform_0, window_bounds = array<i64: 8, 16>}, {pipeline_mode = #tpu.pipeline_mode<synchronous>, transform_indices = @transform_1, window_bounds = array<i64: 16, 32>}, {pipeline_mode = #tpu.pipeline_mode<synchronous>, transform_indices = @transform_2, window_bounds = array<i64: 1, 32>}, {pipeline_mode = #tpu.pipeline_mode<synchronous>, transform_indices = @transform_3, window_bounds = array<i64: 32, 32>}, {pipeline_mode = #tpu.pipeline_mode<synchronous>, transform_indices = @transform_4, window_bounds = array<i64: 1, 32>}, {pipeline_mode = #tpu.pipeline_mode<synchronous>, transform_indices = @transform_5, window_bounds = array<i64: 1, 32>}, {transform_indices = @transform_6, window_bounds = array<i64: 1>}, {transform_indices = @transform_7, window_bounds = array<i64: 1, 8>}]} {
    %c0 = arith.constant 0 : index
    %c0_0 = arith.constant 0 : index
    %0 = vector.load %arg1[%c0, %c0_0] : memref<8x16xf32, #tpu.memory_space<vmem>>, vector<8x16xf32>
    %1 = arith.truncf %0 : vector<8x16xf32> to vector<8x16xbf16>
    %c0_1 = arith.constant 0 : index
    %c0_2 = arith.constant 0 : index
    %2 = vector.load %arg2[%c0_1, %c0_2] : memref<16x32xbf16, #tpu.memory_space<vmem>>, vector<16x32xbf16>
    %cst = arith.constant dense<0.000000e+00> : vector<8x32xf32>
    %3 = tpu.matmul %1, %2, %cst {dimension_numbers = #tpu.dot_dimension_numbers<[1], [0], [0], [1], [0, 0, 1, 1], [], []>} : vector<8x16xbf16>, vector<16x32xbf16>, vector<8x32xf32> -> vector<8x32xf32>
    %c0_3 = arith.constant 0 : index
    %c0_4 = arith.constant 0 : index
    %4 = vector.load %arg3[%c0_3, %c0_4] : memref<1x32xf32, #tpu.memory_space<vmem>>, vector<1x32xf32>
    %5 = vector.broadcast %4 : vector<1x32xf32> to vector<8x32xf32>
    %6 = arith.addf %3, %5 : vector<8x32xf32>
    %cst_5 = arith.constant 2.000000e-01 : f32
    %7 = vector.broadcast %cst_5 : f32 to vector<8x32xf32>
    %8 = arith.mulf %7, %6 : vector<8x32xf32>
    %9 = arith.maximumf %6, %8 : vector<8x32xf32>
    %10 = arith.truncf %9 : vector<8x32xf32> to vector<8x32xbf16>
    %c0_6 = arith.constant 0 : index
    %c0_7 = arith.constant 0 : index
    %11 = vector.load %arg4[%c0_6, %c0_7] : memref<32x32xbf16, #tpu.memory_space<vmem>>, vector<32x32xbf16>
    %cst_8 = arith.constant dense<0.000000e+00> : vector<8x32xf32>
    %12 = tpu.matmul %10, %11, %cst_8 {dimension_numbers = #tpu.dot_dimension_numbers<[1], [0], [0], [1], [0, 0, 1, 1], [], []>} : vector<8x32xbf16>, vector<32x32xbf16>, vector<8x32xf32> -> vector<8x32xf32>
    %c0_9 = arith.constant 0 : index
    %c0_10 = arith.constant 0 : index
    %13 = vector.load %arg5[%c0_9, %c0_10] : memref<1x32xf32, #tpu.memory_space<vmem>>, vector<1x32xf32>
    %14 = vector.broadcast %13 : vector<1x32xf32> to vector<8x32xf32>
    %15 = arith.addf %12, %14 : vector<8x32xf32>
    %cst_11 = arith.constant 2.000000e-01 : f32
    %16 = vector.broadcast %cst_11 : f32 to vector<8x32xf32>
    %17 = arith.mulf %16, %15 : vector<8x32xf32>
    %18 = arith.maximumf %15, %17 : vector<8x32xf32>
    %c0_12 = arith.constant 0 : index
    %c0_13 = arith.constant 0 : index
    %19 = vector.load %arg6[%c0_12, %c0_13] : memref<1x32xf32, #tpu.memory_space<vmem>>, vector<1x32xf32>
    %cst_14 = arith.constant dense<0.000000e+00> : vector<1x8xf32>
    %20 = tpu.matmul %19, %18, %cst_14 {dimension_numbers = #tpu.dot_dimension_numbers<[1], [1], [0], [0], [0, 0, 1, 0], [], []>} : vector<1x32xf32>, vector<8x32xf32>, vector<1x8xf32> -> vector<1x8xf32>
    %c0_15 = arith.constant 0 : index
    %21 = memref.load %arg7[%c0_15] : memref<1xf32, #tpu.memory_space<smem>>
    %22 = vector.broadcast %21 : f32 to vector<1x8xf32>
    %23 = arith.addf %20, %22 : vector<1x8xf32>
    %cst_16 = arith.constant 0.000000e+00 : f32
    %24 = vector.broadcast %cst_16 : f32 to vector<1x8xf32>
    %25 = arith.subf %24, %23 : vector<1x8xf32>
    %26 = math.exp %25 : vector<1x8xf32>
    %cst_17 = arith.constant 1.000000e+00 : f32
    %27 = vector.broadcast %cst_17 : f32 to vector<1x8xf32>
    %28 = arith.addf %27, %26 : vector<1x8xf32>
    %29 = tpu.reciprocal %28 : vector<1x8xf32> -> vector<1x8xf32>
    %c0_18 = arith.constant 0 : index
    %c0_19 = arith.constant 0 : index
    %30 = vector.load %arg8[%c0_18, %c0_19] : memref<1x8xf32, #tpu.memory_space<vmem>>, vector<1x8xf32>
    tpu.vector_store %arg8[%c0_18, %c0_19], %29 {strides = array<i32>} : memref<1x8xf32, #tpu.memory_space<vmem>>, vector<1x8xf32>,
    return
  }
  func.func @transform_0(%arg0: i32) -> (i32, i32) {
    %c0_i32 = arith.constant 0 : i32
    %c0_i32_0 = arith.constant 0 : i32
    return %arg0, %c0_i32 : i32, i32
  }
  func.func @transform_1(%arg0: i32) -> (i32, i32) {
    %c0_i32 = arith.constant 0 : i32
    %c0_i32_0 = arith.constant 0 : i32
    %c0_i32_1 = arith.constant 0 : i32
    return %c0_i32, %c0_i32_0 : i32, i32
  }
  func.func @transform_2(%arg0: i32) -> (i32, i32) {
    %c0_i32 = arith.constant 0 : i32
    %c0_i32_0 = arith.constant 0 : i32
    %c0_i32_1 = arith.constant 0 : i32
    return %c0_i32, %c0_i32_0 : i32, i32
  }
  func.func @transform_3(%arg0: i32) -> (i32, i32) {
    %c0_i32 = arith.constant 0 : i32
    %c0_i32_0 = arith.constant 0 : i32
    %c0_i32_1 = arith.constant 0 : i32
    return %c0_i32, %c0_i32_0 : i32, i32
  }
  func.func @transform_4(%arg0: i32) -> (i32, i32) {
    %c0_i32 = arith.constant 0 : i32
    %c0_i32_0 = arith.constant 0 : i32
    %c0_i32_1 = arith.constant 0 : i32
    return %c0_i32, %c0_i32_0 : i32, i32
  }
  func.func @transform_5(%arg0: i32) -> (i32, i32) {
    %c0_i32 = arith.constant 0 : i32
    %c0_i32_0 = arith.constant 0 : i32
    %c0_i32_1 = arith.constant 0 : i32
    return %c0_i32, %c0_i32_0 : i32, i32
  }
  func.func @transform_6(%arg0: i32) -> i32 {
    %c0_i32 = arith.constant 0 : i32
    %c0_i32_0 = arith.constant 0 : i32
    return %c0_i32 : i32
  }
  func.func @transform_7(%arg0: i32) -> (i32, i32) {
    %c0_i32 = arith.constant 0 : i32
    %c0_i32_0 = arith.constant 0 : i32
    return %c0_i32, %arg0 : i32, i32
  }
}

</mosaic_0001>

<llo_original>
// kernel: tpu_custom_call.1
$region0: #{tpu_custom_call.1}
  #allocation0 [shape = 'u32[]', space=smem, size = 0x4, offset = 0x4, fixed_abs, tag = 'smem constant byte address 0x4 - core index']
  #allocation1 [shape = 'u32[144,128]{1,0:T(1,128)}', space=vmem, size = 0x12000, scoped, tag = 'internal scratch']
  #allocation2 [shape = 'f32[1]{0:T(128)S(6)}', space=smem, size = 0x200, scoped, tag = 'scoped memory for tpu_custom_call.1']
  %s0 = inlined_call_operand.hbm [shape: f32[8,16], index: 0, kind: input, shape index: {}]
  %s1 = inlined_call_operand.hbm [shape: bf16[16,32], index: 1, kind: input, shape index: {}]
  %s2 = inlined_call_operand.vmem [shape: f32[1,32], index: 2, kind: input, shape index: {}]
  %s3 = inlined_call_operand.hbm [shape: bf16[32,32], index: 3, kind: input, shape index: {}]
  %s4 = inlined_call_operand.vmem [shape: f32[1,32], index: 4, kind: input, shape index: {}]
  %s5 = inlined_call_operand.vmem [shape: f32[1,32], index: 5, kind: input, shape index: {}]
  %s6 = inlined_call_operand.<no memory space> [shape: f32[1], index: 6, kind: input, shape index: {}]
  %s7 = inlined_call_operand.hbm [shape: f32[1,8], index: 7, kind: output, shape index: {}]
  %s8 = sld [smem:[#allocation0]]
  $region50: #{tpu_custom_call.1} parent=0
    _
  %s10 = ssub.s32 1, %s8
  %s11 = scalar_select 0, %s10, %s8
  %12 = sst [smem:[#allocation2]] %s6
  $region1: #{tpu_custom_call.1} parent=0
    #allocation3 [shape = 'u8[4096]{0}', space=vmem, size = 0x1000, scoped, tag = 'input window, operand 0, single buffered']
    #allocation4 [shape = 's32[1]{0}', space=sflag, size = 0x4, scoped, tag = 'scoped memory for tpu_custom_call.1']
    #allocation5 [shape = 's32[1]{0}', space=sflag, size = 0x4, scoped, tag = 'scoped memory for tpu_custom_call.1']
    #allocation6 [shape = 'u8[4096]{0}', space=vmem, size = 0x1000, scoped, tag = 'input window, operand 1, single buffered']
    #allocation7 [shape = 's32[1]{0}', space=sflag, size = 0x4, scoped, tag = 'scoped memory for tpu_custom_call.1']
    #allocation8 [shape = 'u8[8192]{0}', space=vmem, size = 0x2000, scoped, tag = 'input window, operand 3, single buffered']
    #allocation9 [shape = 'u8[512]{0}', space=vmem, size = 0x400, scoped, tag = 'output window, operand 0, single buffered']
    %13 = vsyncpa [#allocation4], 0
    %14 = vsyncpa [#allocation7], 0
    %15 = vsyncpa [#allocation5], 0
    // Predicated region
    $region2: #{tpu_custom_call.1} parent=1 // pred_check
      _
    $region3: #{tpu_custom_call.1} parent=1 // pred_check_branch
      %17 = sbr.rel (0) target = $region5
    $region4: #{tpu_custom_call.1} parent=1 // pred_region
      %s19 = ssub.s32 128, 128
      %20 = vsyncadd [#allocation4], %s19
      %s22 = sshll.u32 [#allocation3], 4
      %s23 = int_to_ptr.vmem [resolvable:$true] %s22
      %25 = dma.hbm_to_vmem [thread:$0]  %s0, 128, %s23, [#allocation4]
    $region5: #{tpu_custom_call.1} parent=1 // pred_fallthru
      _
    // Predicated region
    $region6: #{tpu_custom_call.1} parent=1 // pred_check
      _
    $region7: #{tpu_custom_call.1} parent=1 // pred_check_branch
      %27 = sbr.rel (0) target = $region9
    $region8: #{tpu_custom_call.1} parent=1 // pred_region
      %s29 = ssub.s32 128, 128
      %30 = vsyncadd [#allocation7], %s29
      %s31 = sshll.u32 [#allocation6], 4
      %s32 = int_to_ptr.vmem [resolvable:$true] %s31
      %37 = dma.hbm_to_vmem [thread:$0]  %s1, 128, %s32, [#allocation7], 64, 64, 4
    $region9: #{tpu_custom_call.1} parent=1 // pred_fallthru
      _
    // Predicated region
    $region10: #{tpu_custom_call.1} parent=1 // pred_check
      _
    $region11: #{tpu_custom_call.1} parent=1 // pred_check_branch
      %39 = sbr.rel (0) target = $region13
    $region12: #{tpu_custom_call.1} parent=1 // pred_region
      _
    $region13: #{tpu_custom_call.1} parent=1 // pred_fallthru
      _
    // Predicated region
    $region14: #{tpu_custom_call.1} parent=1 // pred_check
      _
    $region15: #{tpu_custom_call.1} parent=1 // pred_check_branch
      %41 = sbr.rel (0) target = $region17
    $region16: #{tpu_custom_call.1} parent=1 // pred_region
      %s43 = ssub.s32 256, 256
      %44 = vsyncadd [#allocation7], %s43
      %s45 = sshll.u32 [#allocation8], 4
      %s46 = int_to_ptr.vmem [resolvable:$true] %s45
      %51 = dma.hbm_to_vmem [thread:$0]  %s3, 256, %s46, [#allocation7], 64, 64, 4
    $region17: #{tpu_custom_call.1} parent=1 // pred_fallthru
      _
    // Predicated region
    $region18: #{tpu_custom_call.1} parent=1 // pred_check
      _
    $region19: #{tpu_custom_call.1} parent=1 // pred_check_branch
      %53 = sbr.rel (0) target = $region21
    $region20: #{tpu_custom_call.1} parent=1 // pred_region
      _
    $region21: #{tpu_custom_call.1} parent=1 // pred_fallthru
      _
    // Predicated region
    $region22: #{tpu_custom_call.1} parent=1 // pred_check
      _
    $region23: #{tpu_custom_call.1} parent=1 // pred_check_branch
      %55 = sbr.rel (0) target = $region25
    $region24: #{tpu_custom_call.1} parent=1 // pred_region
      _
    $region25: #{tpu_custom_call.1} parent=1 // pred_fallthru
      _
    // Predicated region
    $region26: #{tpu_custom_call.1} parent=1 // pred_check
      _
    $region27: #{tpu_custom_call.1} parent=1 // pred_check_branch
      %57 = sbr.rel (0) target = $region29
    $region28: #{tpu_custom_call.1} parent=1 // pred_region
      _
    $region29: #{tpu_custom_call.1} parent=1 // pred_fallthru
      _
    // Predicated region
    $region30: #{tpu_custom_call.1} parent=1 // pred_check
      _
    $region31: #{tpu_custom_call.1} parent=1 // pred_check_branch
      %59 = sbr.rel (0) target = $region33
    $region32: #{tpu_custom_call.1} parent=1 // pred_region
      %60 = dma.done [#allocation4], 128
    $region33: #{tpu_custom_call.1} parent=1 // pred_fallthru
      _
    // Predicated region
    $region34: #{tpu_custom_call.1} parent=1 // pred_check
      _
    $region35: #{tpu_custom_call.1} parent=1 // pred_check_branch
      %62 = sbr.rel (0) target = $region37
    $region36: #{tpu_custom_call.1} parent=1 // pred_region
      %63 = dma.done [#allocation7], 128
    $region37: #{tpu_custom_call.1} parent=1 // pred_fallthru
      _
    // Predicated region
    $region38: #{tpu_custom_call.1} parent=1 // pred_check
      _
    $region39: #{tpu_custom_call.1} parent=1 // pred_check_branch
      %65 = sbr.rel (0) target = $region41
    $region40: #{tpu_custom_call.1} parent=1 // pred_region
      %66 = dma.done [#allocation7], 256
    $region41: #{tpu_custom_call.1} parent=1 // pred_fallthru
      _
    %v68 = vld [vmem:[#allocation3] sm:$0xff]
    %v69 = vpack.c.bf16 %v68, %v68
    %v70 = vld [vmem:[#allocation6] sm:$0xf]
    %v71 = vld [vmem:[#allocation6 + $0x4] sm:$0xf]
    %v72 = vld [vmem:[%s2] sm:$0x1]
    %v74 = vlaneseq
    %v75 = vshrl.u32 %v74, 7
    %v76 = vsub.s32 0, %v75
    %v77 = vrot.slane %v72, %v76
    %v81 = vunpack.c.l.b16 %v70
    %v82 = vunpack.c.l.b16 %v71
    %v83 = vpack.c.b16 %v82, %v81
    %vm85 = vcmask 130048
    %v87 = vsel %vm85, %v69, 0
    %89 = vmatprep.subr.bf16.mxu0 0
    %90 = vmatpush1.bf16.msra.mxu0 0
    %91 = vmatprep.subr.bf16.mxu0 0
    %92 = vmatpush1.bf16.msra.mxu0 0
    %93 = vmatprep.subr.bf16.mxu0 0
    %94 = vmatpush1.bf16.msra.mxu0 0
    %95 = vmatprep.subr.bf16.mxu0 0
    %96 = vmatpush1.bf16.msra.mxu0 0
    %97 = vmatprep.subr.bf16.mxu0 0
    %98 = vmatpush1.bf16.msra.mxu0 0
    %99 = vmatprep.subr.bf16.mxu0 0
    %100 = vmatpush1.bf16.msra.mxu0 0
    %101 = vmatprep.subr.bf16.mxu0 0
    %102 = vmatpush1.bf16.msra.mxu0 0
    %103 = vmatprep.subr.bf16.mxu0 0
    %104 = vmatpush1.bf16.msra.mxu0 %v83
    %105 = vmatprep.subr.bf16.mxu0 0
    %106 = vmatpush2.bf16.msra.mxu0 0
    %107 = vmatprep.subr.bf16.mxu0 0
    %108 = vmatpush2.bf16.msra.mxu0 0
    %109 = vmatprep.subr.bf16.mxu0 0
    %110 = vmatpush2.bf16.msra.mxu0 0
    %111 = vmatprep.subr.bf16.mxu0 0
    %112 = vmatpush2.bf16.msra.mxu0 0
    %113 = vmatprep.subr.bf16.mxu0 0
    %114 = vmatpush2.bf16.msra.mxu0 0
    %115 = vmatprep.subr.bf16.mxu0 0
    %116 = vmatpush2.bf16.msra.mxu0 0
    %117 = vmatprep.subr.bf16.mxu0 0
    %118 = vmatpush2.bf16.msra.mxu0 0
    %119 = vmatprep.subr.bf16.mxu0 0
    %120 = vmatpush2.bf16.msra.mxu0 0
    %121 = vmatprep.mubr.bf16.mxu0 0
    %122 = vmatmul.mubr.bf16.gmra.mxu0 %v87
    %v123 = vpop.f32.mrf.mxu0
    %v124 = vadd.f32 %v77, %v123
    %v125 = vpop.f32.mrf.mxu0
    %v126 = vpop.f32.mrf.mxu0
    %v127 = vpop.f32.mrf.mxu0
    %128 = vdwg.mxu0
    %v129 = vmul.f32 %v124, 0.2
    %v130 = vmax.f32 %v124, %v129
    %v131 = vpack.c.bf16 %v130, %v130
    %v132 = vld [vmem:[#allocation8] sm:$0xf]
    %v133 = vld [vmem:[#allocation8 + $0x4] sm:$0xf]
    %v134 = vld [vmem:[#allocation8 + $0x8] sm:$0xf]
    %v135 = vld [vmem:[#allocation8 + $0xc] sm:$0xf]
    %v136 = vld [vmem:[%s4] sm:$0x1]
    %v138 = vlaneseq
    %v139 = vshrl.u32 %v138, 7
    %v140 = vsub.s32 0, %v139
    %v141 = vrot.slane %v136, %v140
    %v147 = vunpack.c.l.b16 %v132
    %v148 = vunpack.c.l.b16 %v133
    %v149 = vunpack.c.l.b16 %v134
    %v150 = vunpack.c.l.b16 %v135
    %v151 = vpack.c.b16 %v148, %v147
    %v152 = vpack.c.b16 %v150, %v149
    %vm155 = vcmask 261120
    %v157 = vsel %vm155, %v131, 0
    %159 = vmatprep.subr.bf16.mxu0 0
    %160 = vmatpush1.bf16.msra.mxu0 0
    %161 = vmatprep.subr.bf16.mxu0 0
    %162 = vmatpush1.bf16.msra.mxu0 0
    %163 = vmatprep.subr.bf16.mxu0 0
    %164 = vmatpush1.bf16.msra.mxu0 0
    %165 = vmatprep.subr.bf16.mxu0 0
    %166 = vmatpush1.bf16.msra.mxu0 0
    %167 = vmatprep.subr.bf16.mxu0 0
    %168 = vmatpush1.bf16.msra.mxu0 0
    %169 = vmatprep.subr.bf16.mxu0 0
    %170 = vmatpush1.bf16.msra.mxu0 0
    %171 = vmatprep.subr.bf16.mxu0 0
    %172 = vmatpush1.bf16.msra.mxu0 %v152
    %173 = vmatprep.subr.bf16.mxu0 0
    %174 = vmatpush1.bf16.msra.mxu0 %v151
    %175 = vmatprep.subr.bf16.mxu0 0
    %176 = vmatpush2.bf16.msra.mxu0 0
    %177 = vmatprep.subr.bf16.mxu0 0
    %178 = vmatpush2.bf16.msra.mxu0 0
    %179 = vmatprep.subr.bf16.mxu0 0
    %180 = vmatpush2.bf16.msra.mxu0 0
    %181 = vmatprep.subr.bf16.mxu0 0
    %182 = vmatpush2.bf16.msra.mxu0 0
    %183 = vmatprep.subr.bf16.mxu0 0
    %184 = vmatpush2.bf16.msra.mxu0 0
    %185 = vmatprep.subr.bf16.mxu0 0
    %186 = vmatpush2.bf16.msra.mxu0 0
    %187 = vmatprep.subr.bf16.mxu0 0
    %188 = vmatpush2.bf16.msra.mxu0 0
    %189 = vmatprep.subr.bf16.mxu0 0
    %190 = vmatpush2.bf16.msra.mxu0 0
    %191 = vmatprep.mubr.bf16.mxu0 0
    %192 = vmatmul.mubr.bf16.gmra.mxu0 %v157
    %v193 = vpop.f32.mrf.mxu0
    %v194 = vadd.f32 %v141, %v193
    %v195 = vpop.f32.mrf.mxu0
    %v196 = vpop.f32.mrf.mxu0
    %v197 = vpop.f32.mrf.mxu0
    %198 = vdwg.mxu0
    %v199 = vmul.f32 %v194, 0.2
    %v200 = vmax.f32 %v194, %v199
    %v201 = vld [vmem:[%s5] sm:$0x1]
    %s202 = sld [smem:[#allocation2]]
    %v203 = vstv %s202
    %v205 = vsel %vm155, %v201, 0
    %v208 = vsel %vm155, %v200, 0
    %210 = vmatprep.subr.mxu0 0.0
    %211 = vmatpush1.xpose.msra.mxu0 0.0
    %212 = vmatprep.subr.mxu0 0.0
    %213 = vmatpush1.xpose.msra.mxu0 0.0
    %214 = vmatprep.subr.mxu0 0.0
    %215 = vmatpush1.xpose.msra.mxu0 0.0
    %216 = vmatprep.subr.mxu0 0.0
    %217 = vmatpush1.xpose.msra.mxu0 0.0
    %218 = vmatprep.subr.mxu0 0.0
    %219 = vmatpush1.xpose.msra.mxu0 0.0
    %220 = vmatprep.subr.mxu0 0.0
    %221 = vmatpush1.xpose.msra.mxu0 0.0
    %222 = vmatprep.subr.mxu0 0.0
    %223 = vmatpush1.xpose.msra.mxu0 0.0
    %224 = vmatprep.subr.mxu0 0.0
    %225 = vmatpush1.xpose.msra.mxu0 0.0
    %226 = vmatprep.subr.mxu0 0.0
    %227 = vmatpush1.xpose.msra.mxu0 0.0
    %228 = vmatprep.subr.mxu0 0.0
    %229 = vmatpush1.xpose.msra.mxu0 0.0
    %230 = vmatprep.subr.mxu0 0.0
    %231 = vmatpush1.xpose.msra.mxu0 0.0
    %232 = vmatprep.subr.mxu0 0.0
    %233 = vmatpush1.xpose.msra.mxu0 0.0
    %234 = vmatprep.subr.mxu0 0.0
    %235 = vmatpush1.xpose.msra.mxu0 0.0
    %236 = vmatprep.subr.mxu0 0.0
    %237 = vmatpush1.xpose.msra.mxu0 0.0
    %238 = vmatprep.subr.mxu0 0.0
    %239 = vmatpush1.xpose.msra.mxu0 0.0
    %240 = vmatprep.subr.mxu0 0.0
    %241 = vmatpush1.xpose.msra.mxu0 %v208
    %242 = vmatprep.subr.mxu0 0.0
    %243 = vmatpush2.xpose.msra.mxu0 0.0
    %244 = vmatprep.subr.mxu0 0.0
    %245 = vmatpush2.xpose.msra.mxu0 0.0
    %246 = vmatprep.subr.mxu0 0.0
    %247 = vmatpush2.xpose.msra.mxu0 0.0
    %248 = vmatprep.subr.mxu0 0.0
    %249 = vmatpush2.xpose.msra.mxu0 0.0
    %250 = vmatprep.subr.mxu0 0.0
    %251 = vmatpush2.xpose.msra.mxu0 0.0
    %252 = vmatprep.subr.mxu0 0.0
    %253 = vmatpush2.xpose.msra.mxu0 0.0
    %254 = vmatprep.subr.mxu0 0.0
    %255 = vmatpush2.xpose.msra.mxu0 0.0
    %256 = vmatprep.subr.mxu0 0.0
    %257 = vmatpush2.xpose.msra.mxu0 0.0
    %258 = vmatprep.subr.mxu0 0.0
    %259 = vmatpush2.xpose.msra.mxu0 0.0
    %260 = vmatprep.subr.mxu0 0.0
    %261 = vmatpush2.xpose.msra.mxu0 0.0
    %262 = vmatprep.subr.mxu0 0.0
    %263 = vmatpush2.xpose.msra.mxu0 0.0
    %264 = vmatprep.subr.mxu0 0.0
    %265 = vmatpush2.xpose.msra.mxu0 0.0
    %266 = vmatprep.subr.mxu0 0.0
    %267 = vmatpush2.xpose.msra.mxu0 0.0
    %268 = vmatprep.subr.mxu0 0.0
    %269 = vmatpush2.xpose.msra.mxu0 0.0
    %270 = vmatprep.subr.mxu0 0.0
    %271 = vmatpush2.xpose.msra.mxu0 0.0
    %272 = vmatprep.subr.mxu0 0.0
    %273 = vmatpush2.xpose.msra.mxu0 0.0
    %274 = vmatprep.mubr.f32.mxu0 0.0
    %275 = vmatmul.mubr.f32.gmra.mxu0 %v205
    %v276 = vpop.f32.mrf.mxu0
    %v277 = vadd.f32 %v203, %v276
    %v278 = vpop.f32.mrf.mxu0
    %279 = vdwg.mxu0
    %v280 = vsub.f32 0.0, %v277
    %v281 = vmul.f32 %v280, 1.442695
    %v282 = vpow.pop %v281
    %v283 = vadd.f32 %v282, 1.0
    %v284 = vrcp.pop %v283
    %vm285 = vcmask 57344
    %286 = vst.msk [vmem:[#allocation9] sm:$0x1] %vm285, %v284
    // Predicated region
    $region42: #{tpu_custom_call.1} parent=1 // pred_check
      _
    $region43: #{tpu_custom_call.1} parent=1 // pred_check_branch
      %288 = sbr.rel (0) target = $region45
    $region44: #{tpu_custom_call.1} parent=1 // pred_region
      %s290 = ssub.s32 16, 16
      %291 = vsyncadd [#allocation5], %s290
      %s293 = sshll.u32 [#allocation9], 4
      %s294 = int_to_ptr.vmem [resolvable:$true] %s293
      %296 = dma.vmem_to_hbm [thread:$0]  %s294, 16, %s7, [#allocation5]
    $region45: #{tpu_custom_call.1} parent=1 // pred_fallthru
      _
    // Predicated region
    $region46: #{tpu_custom_call.1} parent=1 // pred_check
      _
    $region47: #{tpu_custom_call.1} parent=1 // pred_check_branch
      %298 = sbr.rel (0) target = $region49
    $region48: #{tpu_custom_call.1} parent=1 // pred_region
      %299 = dma.done [#allocation5], 16
    $region49: #{tpu_custom_call.1} parent=1 // pred_fallthru
      _
    %300 = vsyncpa [#allocation4], 1
    %301 = vsyncpa [#allocation7], 1
    %302 = vsyncpa [#allocation5], 1

</llo_original>
